<compile_context>
chip_gen: v7x
topology: tpu7x:2x2x1
jax: 0.10.0
libtpu: 0.0.40
codegen_flags: <defaults>
</compile_context>

<pallas_src>
import numpy as np
import jax
import jax.numpy as jnp
from jax import lax
from jax.experimental import pallas as pl
from jax.experimental.pallas import tpu as pltpu


# ----------------------------------------------------------------------------
# Fused kernel: mean over channels + 3-tap conv along series (zero pad, stride 1)
#               + sigmoid + broadcast multiply
# ----------------------------------------------------------------------------
def spatial_attention_kernel(x_ref, w_ref, b_ref, o_ref):
    # x_ref / o_ref : [1, C, S, M]  (one batch element; modal on the lane axis,
    #                                series on the sublane axis)
    # w_ref         : (3,) SMEM     Conv2d(1, 1, (3, 1)) taps along `series`
    # b_ref         : (1,) SMEM     conv bias
    _, C, S, M = x_ref.shape
    x = x_ref[...]                                        # [1, C, S, M]

    # mean over channels: C is a leading (non-lane/sublane) dim -> cheap vreg adds
    att = jnp.mean(x, axis=1)                             # [1, S, M]

    # 3-tap conv along `series` with zero padding, computed entirely in registers
    # from shifted static slices (no scratch buffer, no masked partial stores).
    zero_row = jnp.zeros((1, 1, M), jnp.float32)
    prev = jnp.concatenate([zero_row, att[:, : S - 1, :]], axis=1)  # att[s-1]; 0 at s=0
    nxt = jnp.concatenate([att[:, 1:, :], zero_row], axis=1)        # att[s+1]; 0 at s=S-1
    conv = w_ref[0] * prev + w_ref[1] * att + w_ref[2] * nxt + b_ref[0]
    att = jax.nn.sigmoid(conv)                            # [1, S, M]

    # broadcast multiply over channels
    o_ref[...] = x * att[:, None, :, :]


def spatial_attention_forward(x, att_w, att_b):
    """x: [B, C, series, modal] (PyTorch NCHW layout). Returns x * sigmoid(conv(mean_c(x)))."""
    B, C, S, M = x.shape
    return pl.pallas_call(
        spatial_attention_kernel,
        out_shape=jax.ShapeDtypeStruct((B, C, S, M), jnp.float32),
        grid=(B,),
        in_specs=[
            pl.BlockSpec((1, C, S, M), lambda b: (b, 0, 0, 0)),          # x (batch-tiled)
            pl.BlockSpec(memory_space=pltpu.MemorySpace.SMEM),           # conv taps (3,)
            pl.BlockSpec(memory_space=pltpu.MemorySpace.SMEM),           # conv bias (1,)
        ],
        out_specs=pl.BlockSpec((1, C, S, M), lambda b: (b, 0, 0, 0)),
        compiler_params=pltpu.CompilerParams(
            dimension_semantics=("parallel",)),                          # shard batch across TCs
    )(x, att_w, att_b)


# ----------------------------------------------------------------------------
# Pure-JAX reference (mirrors the PyTorch forward exactly) for validation
# ----------------------------------------------------------------------------
def reference_forward(x, att_w, att_b):
    att = jnp.mean(x, axis=1, keepdims=True)                             # [B, 1, S, M]
    att = lax.conv_general_dilated(
        att, att_w.reshape(1, 1, 3, 1), (1, 1), ((1, 1), (0, 0)),
        dimension_numbers=("NCHW", "OIHW", "NCHW"))
    att = jax.nn.sigmoid(att + att_b[None, :, None, None])
    return x * att


if __name__ == "__main__":
    # x.shape: [b, c, series, modal]
    B, C, S, M = 2, 4, 16, 16
    key = jax.random.PRNGKey(0)
    kx, kw, kb = jax.random.split(key, 3)
    x = jax.random.normal(kx, (B, C, S, M), jnp.float32)
    att_w = 0.5 * jax.random.normal(kw, (3,), jnp.float32)   # Conv2d(1,1,(3,1)) weight
    att_b = 0.1 * jax.random.normal(kb, (1,), jnp.float32)   # Conv2d bias

    out = spatial_attention_forward(x, att_w, att_b)
    out = jax.block_until_ready(out)

    ref = reference_forward(x, att_w, att_b)
    np.testing.assert_allclose(np.asarray(out), np.asarray(ref), rtol=1e-4, atol=1e-5)

    print("KERNEL_OK")
</pallas_src>

<mosaic_0001>
module attributes {stable_mosaic.version = 11 : i64} {
  func.func @spatial_attention_kernel(%arg0: i32, %arg1: memref<1x4x16x16xf32, #tpu.memory_space<vmem>>, %arg2: memref<3xf32, #tpu.memory_space<smem>>, %arg3: memref<1xf32, #tpu.memory_space<smem>>, %arg4: memref<1x4x16x16xf32, #tpu.memory_space<vmem>>) attributes {dimension_semantics = [#tpu.dimension_semantics<parallel>], iteration_bounds = array<i64: 2>, scalar_prefetch = 0 : i64, scratch_operands = 0 : i64, tpu.core_type = #tpu.core_type<tc>, window_params = [{transform_indices = @transform_0, window_bounds = array<i64: 1, 4, 16, 16>}, {transform_indices = @transform_1, window_bounds = array<i64: 3>}, {transform_indices = @transform_2, window_bounds = array<i64: 1>}, {transform_indices = @transform_3, window_bounds = array<i64: 1, 4, 16, 16>}]} {
    %c0 = arith.constant 0 : index
    %c0_0 = arith.constant 0 : index
    %c0_1 = arith.constant 0 : index
    %c0_2 = arith.constant 0 : index
    %0 = vector.load %arg1[%c0, %c0_0, %c0_1, %c0_2] : memref<1x4x16x16xf32, #tpu.memory_space<vmem>>, vector<1x4x16x16xf32>
    %cst = arith.constant dense<0.000000e+00> : vector<1x16x16xf32>
    %1 = vector.multi_reduction <add>, %0, %cst [1] : vector<1x4x16x16xf32> to vector<1x16x16xf32>
    %cst_3 = arith.constant 4.000000e+00 : f32
    %2 = vector.broadcast %cst_3 : f32 to vector<1x16x16xf32>
    %3 = arith.divf %1, %2 : vector<1x16x16xf32>
    %cst_4 = arith.constant 0.000000e+00 : f32
    %4 = vector.broadcast %cst_4 : f32 to vector<1x1x16xf32>
    %5 = vector.extract_strided_slice %3 {offsets = [0, 0, 0], sizes = [1, 15, 16], strides = [1, 1, 1]} : vector<1x16x16xf32> to vector<1x15x16xf32>
    %6 = tpu.concatenate %4, %5 in 1 : vector<1x1x16xf32>, vector<1x15x16xf32> -> vector<1x16x16xf32>
    %7 = vector.extract_strided_slice %3 {offsets = [0, 1, 0], sizes = [1, 15, 16], strides = [1, 1, 1]} : vector<1x16x16xf32> to vector<1x15x16xf32>
    %8 = tpu.concatenate %7, %4 in 1 : vector<1x15x16xf32>, vector<1x1x16xf32> -> vector<1x16x16xf32>
    %c0_5 = arith.constant 0 : index
    %9 = memref.load %arg2[%c0_5] : memref<3xf32, #tpu.memory_space<smem>>
    %10 = vector.broadcast %9 : f32 to vector<1x16x16xf32>
    %11 = arith.mulf %10, %6 : vector<1x16x16xf32>
    %c1 = arith.constant 1 : index
    %12 = memref.load %arg2[%c1] : memref<3xf32, #tpu.memory_space<smem>>
    %13 = vector.broadcast %12 : f32 to vector<1x16x16xf32>
    %14 = arith.mulf %13, %3 : vector<1x16x16xf32>
    %15 = arith.addf %11, %14 : vector<1x16x16xf32>
    %c2 = arith.constant 2 : index
    %16 = memref.load %arg2[%c2] : memref<3xf32, #tpu.memory_space<smem>>
    %17 = vector.broadcast %16 : f32 to vector<1x16x16xf32>
    %18 = arith.mulf %17, %8 : vector<1x16x16xf32>
    %19 = arith.addf %15, %18 : vector<1x16x16xf32>
    %c0_6 = arith.constant 0 : index
    %20 = memref.load %arg3[%c0_6] : memref<1xf32, #tpu.memory_space<smem>>
    %21 = vector.broadcast %20 : f32 to vector<1x16x16xf32>
    %22 = arith.addf %19, %21 : vector<1x16x16xf32>
    %23 = arith.negf %22 : vector<1x16x16xf32>
    %24 = math.exp %23 : vector<1x16x16xf32>
    %cst_7 = arith.constant 1.000000e+00 : f32
    %25 = vector.broadcast %cst_7 : f32 to vector<1x16x16xf32>
    %26 = arith.addf %25, %24 : vector<1x16x16xf32>
    %27 = arith.divf %25, %26 : vector<1x16x16xf32>
    %28 = vector.shape_cast %27 : vector<1x16x16xf32> to vector<1x1x16x16xf32>
    %29 = vector.broadcast %28 : vector<1x1x16x16xf32> to vector<1x4x16x16xf32>
    %30 = arith.mulf %0, %29 : vector<1x4x16x16xf32>
    %c0_8 = arith.constant 0 : index
    %c0_9 = arith.constant 0 : index
    %c0_10 = arith.constant 0 : index
    %c0_11 = arith.constant 0 : index
    %31 = vector.load %arg4[%c0_8, %c0_9, %c0_10, %c0_11] : memref<1x4x16x16xf32, #tpu.memory_space<vmem>>, vector<1x4x16x16xf32>
    tpu.vector_store %arg4[%c0_8, %c0_9, %c0_10, %c0_11], %30 {strides = array<i32>} : memref<1x4x16x16xf32, #tpu.memory_space<vmem>>, vector<1x4x16x16xf32>,
    return
  }
  func.func @transform_0(%arg0: i32) -> (i32, i32, i32, i32) {
    %c0_i32 = arith.constant 0 : i32
    %c0_i32_0 = arith.constant 0 : i32
    %c0_i32_1 = arith.constant 0 : i32
    %c0_i32_2 = arith.constant 0 : i32
    return %arg0, %c0_i32, %c0_i32_0, %c0_i32_1 : i32, i32, i32, i32
  }
  func.func @transform_1(%arg0: i32) -> i32 {
    %c0_i32 = arith.constant 0 : i32
    %c0_i32_0 = arith.constant 0 : i32
    return %c0_i32 : i32
  }
  func.func @transform_2(%arg0: i32) -> i32 {
    %c0_i32 = arith.constant 0 : i32
    %c0_i32_0 = arith.constant 0 : i32
    return %c0_i32 : i32
  }
  func.func @transform_3(%arg0: i32) -> (i32, i32, i32, i32) {
    %c0_i32 = arith.constant 0 : i32
    %c0_i32_0 = arith.constant 0 : i32
    %c0_i32_1 = arith.constant 0 : i32
    %c0_i32_2 = arith.constant 0 : i32
    return %arg0, %c0_i32, %c0_i32_0, %c0_i32_1 : i32, i32, i32, i32
  }
}

</mosaic_0001>

<llo_original>
// kernel: tpu_custom_call.1
$region0: #{tpu_custom_call.1}
  #allocation0 [shape = 'u32[]', space=smem, size = 0x4, offset = 0x4, fixed_abs, tag = 'smem constant byte address 0x4 - core index']
  #allocation1 [shape = 'u32[144,128]{1,0:T(1,128)}', space=vmem, size = 0x12000, scoped, tag = 'internal scratch']
  #allocation2 [shape = 'f32[1]{0:T(128)S(6)}', space=smem, size = 0x200, scoped, tag = 'scoped memory for tpu_custom_call.1']
  %s0 = inlined_call_operand.hbm [shape: f32[2,4,16,16], index: 0, kind: input, shape index: {}]
  %s1 = inlined_call_operand.vmem [shape: f32[3], index: 1, kind: input, shape index: {}]
  %s2 = inlined_call_operand.<no memory space> [shape: f32[1], index: 2, kind: input, shape index: {}]
  %s3 = inlined_call_operand.hbm [shape: f32[2,4,16,16], index: 3, kind: output, shape index: {}]
  %s4 = sld [smem:[#allocation0]]
  $region53: #{tpu_custom_call.1} parent=0
    _
  %s6 = ssub.s32 1, %s4
  %s7 = scalar_select 0, %s6, %s4
  %8 = sst [smem:[#allocation2]] %s2
  $region1: #{tpu_custom_call.1} parent=0
    #allocation3 [shape = 'u8[65536]{0}', space=vmem, size = 0x10000, scoped, tag = 'input window, operand 0']
    #allocation4 [shape = 's32[2]{0}', space=sflag, size = 0x8, scoped, tag = 'scoped memory for tpu_custom_call.1']
    #allocation5 [shape = 's32[2]{0}', space=sflag, size = 0x8, scoped, tag = 'scoped memory for tpu_custom_call.1']
    #allocation6 [shape = 's32[2]{0}', space=sflag, size = 0x8, scoped, tag = 'scoped memory for tpu_custom_call.1']
    #allocation7 [shape = 'u8[512]{0}', space=smem, size = 0x200, scoped, tag = 'input window, operand 1, single buffered']
    #allocation8 [shape = 'u8[65536]{0}', space=vmem, size = 0x10000, scoped, tag = 'output window, operand 0']
    %9 = vsyncpa [#allocation4], 0
    %s10 = scalar_lea.sflag [#allocation4], 1
    %11 = vsyncpa %s10, 0
    %12 = vsyncpa [#allocation6], 0
    %13 = vsyncpa [#allocation5], 0
    %s14 = scalar_lea.sflag [#allocation5], 1
    %15 = vsyncpa %s14, 0
    loop: start=0, step=1, limit=4
    $region2: #{tpu_custom_call.1} parent=1 // loop_pre_header
      _
    $region3: #{tpu_custom_call.1} parent=1 // loop_header
      %s17 = sphi 0, %s21
      %p18 = scmp.ge.s32.totalorder %s17, 4
      %s27 = sphi 0, %s29
      %s30 = sphi 0, %s27
      %s31 = sphi 0, %s30
      %s47 = sphi 0, %s31
      %s51 = sphi 0, %s51
      %s53 = sphi 0, %s51
      %s54 = sphi 0, %s53
      %s68 = sphi 0, %s54
      %s72 = sphi 0, %s72
      %s74 = sphi 0, %s72
      %s75 = sphi 0, %s74
      %s89 = sphi 0, %s75
      %s95 = sphi 0, %s97
      %s98 = sphi 0, %s95
      %s99 = sphi 0, %s98
      %s115 = sphi 0, %s99
    $region4: #{tpu_custom_call.1} parent=1 // loop_header_branch
      %20 = sbr.rel (%p18) target = $region8
    $region5: #{tpu_custom_call.1} parent=1 // loop_body
      %s22 = ssub.s32 %s17, 1
      %s23 = ssub.s32 %s17, 2
      %s24 = sadd.s32 %s17, 1
      %s25 = ssub.s32 %s17, %s24
      %p26 = scmp.eq.s32.totalorder %s25, 0
      %s28 = sadd.s32 %s27, 1
      %s29 = scalar_select %p26, %s27, %s28
      %p32 = pneg %p26
      %p33 = scmp.eq.s32.totalorder %s17, 1
      %p34 = por %p32, %p33
      %p35 = scmp.ne.s32.totalorder %s27, %s30
      %p36 = scmp.eq.s32.totalorder %s17, 0
      %p37 = por %p35, %p36
      %p38 = scmp.ne.s32.totalorder %s27, %s30
      %p39 = scmp.eq.s32.totalorder %s22, 1
      %p40 = por %p38, %p39
      %p41 = scmp.ne.s32.totalorder %s30, %s31
      %p42 = scmp.eq.s32.totalorder %s22, 0
      %p43 = por %p41, %p42
      %p44 = scmp.ne.s32.totalorder %s30, %s31
      %p45 = scmp.eq.s32.totalorder %s23, 1
      %p46 = por %p44, %p45
      %p48 = scmp.ne.s32.totalorder %s31, %s47
      %p49 = scmp.eq.s32.totalorder %s23, 0
      %p50 = por %p48, %p49
      %s52 = sadd.s32 %s51, 1
      %p55 = scmp.eq.s32.totalorder %s17, 1
      %p56 = scmp.ne.s32.totalorder %s51, %s53
      %p57 = scmp.eq.s32.totalorder %s17, 0
      %p58 = por %p56, %p57
      %p59 = scmp.ne.s32.totalorder %s51, %s53
      %p60 = scmp.eq.s32.totalorder %s22, 1
      %p61 = por %p59, %p60
      %p62 = scmp.ne.s32.totalorder %s53, %s54
      %p63 = scmp.eq.s32.totalorder %s22, 0
      %p64 = por %p62, %p63
      %p65 = scmp.ne.s32.totalorder %s53, %s54
      %p66 = scmp.eq.s32.totalorder %s23, 1
      %p67 = por %p65, %p66
      %p69 = scmp.ne.s32.totalorder %s54, %s68
      %p70 = scmp.eq.s32.totalorder %s23, 0
      %p71 = por %p69, %p70
      %s73 = sadd.s32 %s72, 1
      %p76 = scmp.eq.s32.totalorder %s17, 1
      %p77 = scmp.ne.s32.totalorder %s72, %s74
      %p78 = scmp.eq.s32.totalorder %s17, 0
      %p79 = por %p77, %p78
      %p80 = scmp.ne.s32.totalorder %s72, %s74
      %p81 = scmp.eq.s32.totalorder %s22, 1
      %p82 = por %p80, %p81
      %p83 = scmp.ne.s32.totalorder %s74, %s75
      %p84 = scmp.eq.s32.totalorder %s22, 0
      %p85 = por %p83, %p84
      %p86 = scmp.ne.s32.totalorder %s74, %s75
      %p87 = scmp.eq.s32.totalorder %s23, 1
      %p88 = por %p86, %p87
      %p90 = scmp.ne.s32.totalorder %s75, %s89
      %p91 = scmp.eq.s32.totalorder %s23, 0
      %p92 = por %p90, %p91
      %s93 = ssub.s32 %s17, %s24
      %p94 = scmp.eq.s32.totalorder %s93, 0
      %s96 = sadd.s32 %s95, 1
      %s97 = scalar_select %p94, %s95, %s96
      %p100 = pneg %p94
      %p101 = scmp.eq.s32.totalorder %s17, 1
      %p102 = por %p100, %p101
      %p103 = scmp.ne.s32.totalorder %s95, %s98
      %p104 = scmp.eq.s32.totalorder %s17, 0
      %p105 = por %p103, %p104
      %p106 = scmp.ne.s32.totalorder %s95, %s98
      %p107 = scmp.eq.s32.totalorder %s22, 1
      %p108 = por %p106, %p107
      %p109 = scmp.ne.s32.totalorder %s98, %s99
      %p110 = scmp.eq.s32.totalorder %s22, 0
      %p111 = por %p109, %p110
      %p112 = scmp.ne.s32.totalorder %s98, %s99
      %p113 = scmp.eq.s32.totalorder %s23, 1
      %p114 = por %p112, %p113
      %p116 = scmp.ne.s32.totalorder %s99, %s115
      %p117 = scmp.eq.s32.totalorder %s23, 0
      %p118 = por %p116, %p117
      %p119 = scmp.le.s32.totalorder 1, %s17
      %p120 = scmp.lt.s32.totalorder %s17, 3
      %p121 = pnand %p119, %p120
      %p122 = pneg %p121
      // Predicated region
      $region9: #{tpu_custom_call.1} parent=5 // pred_check
        _
      $region10: #{tpu_custom_call.1} parent=5 // pred_check_branch
        %124 = sbr.rel (%p121) target = $region12
      $region11: #{tpu_custom_call.1} parent=5 // pred_region
        %s125 = ssub.s32 %s17, 1
        // Predicated region
        $region13: #{tpu_custom_call.1} parent=11 // pred_check
          %p126 = pneg %p64
        $region14: #{tpu_custom_call.1} parent=11 // pred_check_branch
          %128 = sbr.rel (%p126) target = $region16
        $region15: #{tpu_custom_call.1} parent=11 // pred_region
          %s130 = ssub.s32 16, 16
          %131 = vsyncadd [#allocation6], %s130
          %s133 = sshll.u32 %s1, 4
          %s134 = int_to_ptr.vmem [resolvable:$true] %s133
          %136 = dma.vmem_to_smem %s134, 16, [#allocation7], [#allocation6]
        $region16: #{tpu_custom_call.1} parent=11 // pred_fallthru
          _
        // Predicated region
        $region17: #{tpu_custom_call.1} parent=11 // pred_check
          %p137 = pneg %p85
        $region18: #{tpu_custom_call.1} parent=11 // pred_check_branch
          %139 = sbr.rel (%p137) target = $region20
        $region19: #{tpu_custom_call.1} parent=11 // pred_region
          _
        $region20: #{tpu_custom_call.1} parent=11 // pred_fallthru
          _
      $region12: #{tpu_custom_call.1} parent=5 // pred_fallthru
        _
      %p140 = scmp.lt.s32.totalorder %s17, 2
      // Predicated region
      $region21: #{tpu_custom_call.1} parent=5 // pred_check
        %p141 = pneg %p140
      $region22: #{tpu_custom_call.1} parent=5 // pred_check_branch
        %143 = sbr.rel (%p141) target = $region24
      $region23: #{tpu_custom_call.1} parent=5 // pred_region
        // Predicated region
        $region25: #{tpu_custom_call.1} parent=23 // pred_check
          %p144 = pneg %p37
        $region26: #{tpu_custom_call.1} parent=23 // pred_check_branch
          %146 = sbr.rel (%p144) target = $region28
        $region27: #{tpu_custom_call.1} parent=23 // pred_region
          %s147 = sand.u32 %s27, 1
          %s148 = scalar_lea.sflag [#allocation4], %s147
          %s149 = sand.u32 %s27, 1
          %s150 = smul.addr %s149, 64
          %s151 = scalar_lea.vmem [#allocation3], %s150
          %s153 = ssub.s32 1024, 1024
          %154 = vsyncadd %s148, %s153
          %s155 = smul.addr %s17, 8
          %s156 = smul.addr %s155, 128
          %s157 = scalar_lea.hbm %s0, %s156
          %s158 = sshll.u32 %s151, 4
          %s159 = int_to_ptr.vmem [resolvable:$true] %s158
          %164 = dma.hbm_to_vmem [thread:$0]  %s157, 1024, %s159, %s148, 128, 128, 8
        $region28: #{tpu_custom_call.1} parent=23 // pred_fallthru
          _
      $region24: #{tpu_custom_call.1} parent=5 // pred_fallthru
        _
      %p165 = scmp.le.s32.totalorder 1, %s17
      %p166 = scmp.lt.s32.totalorder %s17, 3
      %p167 = pnand %p165, %p166
      %p168 = pneg %p167
      // Predicated region
      $region29: #{tpu_custom_call.1} parent=5 // pred_check
        _
      $region30: #{tpu_custom_call.1} parent=5 // pred_check_branch
        %170 = sbr.rel (%p167) target = $region32
      $region31: #{tpu_custom_call.1} parent=5 // pred_region
        %s171 = ssub.s32 %s17, 1
        %s172 = sand.u32 %s30, 1
        %s173 = scalar_lea.sflag [#allocation4], %s172
        %s174 = sand.u32 %s30, 1
        %s175 = smul.addr %s174, 64
        %s176 = scalar_lea.vmem [#allocation3], %s175
        // Predicated region
        $region33: #{tpu_custom_call.1} parent=31 // pred_check
          %p177 = pneg %p43
        $region34: #{tpu_custom_call.1} parent=31 // pred_check_branch
          %179 = sbr.rel (%p177) target = $region36
        $region35: #{tpu_custom_call.1} parent=31 // pred_region
          %180 = dma.done %s173, 1024
        $region36: #{tpu_custom_call.1} parent=31 // pred_fallthru
          _
        // Predicated region
        $region37: #{tpu_custom_call.1} parent=31 // pred_check
          %p181 = pneg %p64
        $region38: #{tpu_custom_call.1} parent=31 // pred_check_branch
          %183 = sbr.rel (%p181) target = $region40
        $region39: #{tpu_custom_call.1} parent=31 // pred_region
          %184 = dma.done [#allocation6], 16
        $region40: #{tpu_custom_call.1} parent=31 // pred_fallthru
          _
        %185 = sfence
        %s186 = sand.u32 %s30, 1
        %s187 = scalar_lea.sflag [#allocation4], %s186
        %s188 = sand.u32 %s30, 1
        %s189 = smul.addr %s188, 64
        %s190 = scalar_lea.vmem [#allocation3], %s189
        %p191 = pneg %p43
        %p192 = pneg %p40
        %p193 = pneg %p64
        %p194 = pneg %p61
        %p195 = pneg %p85
        %p196 = pneg %p82
        %p197 = pneg %p111
        %p198 = pneg %p108
        %s199 = sand.u32 %s98, 1
        %s200 = scalar_lea.sflag [#allocation5], %s199
        %s201 = sand.u32 %s98, 1
        %s202 = smul.addr %s201, 64
        %s203 = scalar_lea.vmem [#allocation8], %s202
        %v204 = vld [vmem:[%s176] sm:$0xff]
        %v205 = vld [vmem:[%s176 + $0x8] sm:$0xff]
        %v206 = vld [vmem:[%s176 + $0x10] sm:$0xff]
        %v207 = vld [vmem:[%s176 + $0x18] sm:$0xff]
        %v208 = vld [vmem:[%s176 + $0x20] sm:$0xff]
        %v209 = vld [vmem:[%s176 + $0x28] sm:$0xff]
        %v210 = vld [vmem:[%s176 + $0x30] sm:$0xff]
        %v211 = vld [vmem:[%s176 + $0x38] sm:$0xff]
        %vm212 = vcmask 130048
        %v213 = vsel %vm212, %v204, 0.0
        %v214 = vsel %vm212, %v206, 0.0
        %v215 = vadd.f32 %v213, %v214
        %v216 = vsel %vm212, %v208, 0.0
        %v217 = vadd.f32 %v215, %v216
        %v218 = vsel %vm212, %v210, 0.0
        %v219 = vadd.f32 %v217, %v218
        %v220 = vsel %vm212, %v205, 0.0
        %v221 = vsel %vm212, %v207, 0.0
        %v222 = vadd.f32 %v220, %v221
        %v223 = vsel %vm212, %v209, 0.0
        %v224 = vadd.f32 %v222, %v223
        %v225 = vsel %vm212, %v211, 0.0
        %v226 = vadd.f32 %v224, %v225
        %v227 = vrcp.pop 4.0
        %v228 = vmul.f32 %v219, %v227
        %v229 = vmul.f32 %v226, %v227
        %vm232 = vcmask 1040384
        %v233 = vrot.slane %v228, 7
        %v234 = vrot.slane %v229, 7
        %v235 = vsel %vm232, %v233, %v234
        %v238 = vsel %vm232, 0.0, %v233
        %vm239 = vcmask 1046528
        %v240 = vrot.slane %v228, 1
        %v241 = vrot.slane %v229, 1
        %v242 = vsel %vm239, %v240, %v241
        %v245 = vsel %vm239, %v241, 0.0
        %s246 = sld [smem:[#allocation7]]
        %v247 = vstv %s246
        %v248 = vmul.f32 %v247, %v238
        %v249 = vmul.f32 %v247, %v235
        %s250 = sld [smem:[#allocation7 + $0x1]]
        %v251 = vstv %s250
        %v252 = vmul.f32 %v251, %v228
        %v253 = vmul.f32 %v251, %v229
        %v254 = vadd.f32 %v248, %v252
        %v255 = vadd.f32 %v249, %v253
        %s256 = sld [smem:[#allocation7 + $0x2]]
        %v257 = vstv %s256
        %v258 = vmul.f32 %v257, %v242
        %v259 = vmul.f32 %v257, %v245
        %v260 = vadd.f32 %v254, %v258
        %v261 = vadd.f32 %v255, %v259
        %s262 = sld [smem:[#allocation2]]
        %v263 = vstv %s262
        %v264 = vadd.f32 %v260, %v263
        %v265 = vadd.f32 %v261, %v263
        %v266 = vxor.u32 %v264, 2147483648
        %v267 = vxor.u32 %v265, 2147483648
        %v268 = vmul.f32 %v266, 1.442695
        %v269 = vpow.pop %v268
        %v270 = vmul.f32 %v267, 1.442695
        %v271 = vpow.pop %v270
        %v272 = vadd.f32 %v269, 1.0
        %v273 = vadd.f32 %v271, 1.0
        %v274 = vrcp.pop %v272
        %v275 = vmul.f32 1.0, %v274
        %v276 = vrcp.pop %v273
        %v277 = vmul.f32 1.0, %v276
        %v278 = vmul.f32 %v204, %v275
        %v279 = vmul.f32 %v205, %v277
        %v280 = vmul.f32 %v206, %v275
        %v281 = vmul.f32 %v207, %v277
        %v282 = vmul.f32 %v208, %v275
        %v283 = vmul.f32 %v209, %v277
        %v284 = vmul.f32 %v210, %v275
        %v285 = vmul.f32 %v211, %v277
        %286 = vst.msk [vmem:[%s203] sm:$0xff] %vm212, %v278
        %287 = vst.msk [vmem:[%s203 + $0x8] sm:$0xff] %vm212, %v279
        %288 = vst.msk [vmem:[%s203 + $0x10] sm:$0xff] %vm212, %v280
        %289 = vst.msk [vmem:[%s203 + $0x18] sm:$0xff] %vm212, %v281
        %290 = vst.msk [vmem:[%s203 + $0x20] sm:$0xff] %vm212, %v282
        %291 = vst.msk [vmem:[%s203 + $0x28] sm:$0xff] %vm212, %v283
        %292 = vst.msk [vmem:[%s203 + $0x30] sm:$0xff] %vm212, %v284
        %293 = vst.msk [vmem:[%s203 + $0x38] sm:$0xff] %vm212, %v285
        %s294 = sand.u32 %s98, 1
        %s295 = scalar_lea.sflag [#allocation5], %s294
        %s296 = sand.u32 %s98, 1
        %s297 = smul.addr %s296, 64
        %s298 = scalar_lea.vmem [#allocation8], %s297
        // Predicated region
        $region41: #{tpu_custom_call.1} parent=31 // pred_check
          %p299 = pneg %p108
        $region42: #{tpu_custom_call.1} parent=31 // pred_check_branch
          %301 = sbr.rel (%p299) target = $region44
        $region43: #{tpu_custom_call.1} parent=31 // pred_region
          %s303 = ssub.s32 1024, 1024
          %304 = vsyncadd %s295, %s303
          %s305 = smul.addr %s22, 8
          %s306 = smul.addr %s305, 128
          %s307 = scalar_lea.hbm %s3, %s306
          %s308 = sshll.u32 %s298, 4
          %s309 = int_to_ptr.vmem [resolvable:$true] %s308
          %314 = dma.vmem_to_hbm [thread:$0]  %s309, 1024, %s307, %s295, 128, 128, 8
        $region44: #{tpu_custom_call.1} parent=31 // pred_fallthru
          _
      $region32: #{tpu_custom_call.1} parent=5 // pred_fallthru
        _
      %p315 = scmp.le.s32.totalorder 2, %s17
      // Predicated region
      $region45: #{tpu_custom_call.1} parent=5 // pred_check
        %p316 = pneg %p315
      $region46: #{tpu_custom_call.1} parent=5 // pred_check_branch
        %318 = sbr.rel (%p316) target = $region48
      $region47: #{tpu_custom_call.1} parent=5 // pred_region
        %s319 = ssub.s32 %s17, 2
        // Predicated region
        $region49: #{tpu_custom_call.1} parent=47 // pred_check
          %p320 = pneg %p114
        $region50: #{tpu_custom_call.1} parent=47 // pred_check_branch
          %322 = sbr.rel (%p320) target = $region52
        $region51: #{tpu_custom_call.1} parent=47 // pred_region
          %s323 = sand.u32 %s99, 1
          %s324 = scalar_lea.sflag [#allocation5], %s323
          %s325 = sand.u32 %s99, 1
          %s326 = smul.addr %s325, 64
          %s327 = scalar_lea.vmem [#allocation8], %s326
          %328 = dma.done %s324, 1024
        $region52: #{tpu_custom_call.1} parent=47 // pred_fallthru
          _
      $region48: #{tpu_custom_call.1} parent=5 // pred_fallthru
        _
    $region6: #{tpu_custom_call.1} parent=1 // loop_footer
      %s21 = sadd.s32 1, %s17
    $region7: #{tpu_custom_call.1} parent=1 // loop_footer_branch
      %16 = sbr.rel target = $region3
    $region8: #{tpu_custom_call.1} parent=1 // loop_exit
      _
    %329 = vsyncpa [#allocation4], 1
    %s330 = scalar_lea.sflag [#allocation4], 1
    %331 = vsyncpa %s330, 1
    %332 = vsyncpa [#allocation5], 1
    %s333 = scalar_lea.sflag [#allocation5], 1
    %334 = vsyncpa %s333, 1
    %335 = vsyncpa [#allocation6], 1
    %s336 = scalar_lea.sflag [#allocation6], 1
    %337 = vsyncpa %s336, 1

</llo_original>
